<compile_context>
chip_gen: v5e
topology: v5e:2x2
jax: 0.10.0
libtpu: 0.0.40
codegen_flags: <defaults>
</compile_context>

<pallas_src>
import functools
import math

import jax
import jax.numpy as jnp
from jax.experimental import pallas as pl
from jax.experimental.pallas import tpu as pltpu

_LANES = 128
_TILE_TARGET_BYTES = 2 * 1024 * 1024    # ~2 MiB per block per stream
_VMEM_LIMIT_BYTES = 32 * 1024 * 1024    # explicit: v5e scoped default is 16 MiB

# minimum sublane granularity per itemsize (f32 -> 8, bf16 -> 16, int8/fp8 -> 32)
_PACKING = {4: 8, 2: 16, 1: 32}


def _num_tensorcores() -> int:
    """Best-effort TensorCores-per-chip (2 on v7x, 1 on v5e/v6e)."""
    try:
        kind = jax.devices()[0].device_kind.lower()
    except Exception:
        return 1
    return 2 if ("v7" in kind or "7x" in kind) else 1


def _lif_kernel(u_ref, s_ref, i_ref, u_out_ref, s_out_ref, *, decay):
    # Compute in f32 regardless of storage dtype; cast only on store.
    u = u_ref[...].astype(jnp.float32)
    s = s_ref[...].astype(jnp.float32)
    i = i_ref[...].astype(jnp.float32)
    u_new = decay * u * (1.0 - s) + i
    u_out_ref[...] = u_new.astype(u_out_ref.dtype)
    # HeavisideBoxcarCall forward: step function at 0 (>= 0 -> 1).
    s_out_ref[...] = (u_new >= 0.0).astype(s_out_ref.dtype)


class LIFNodePallas:
    """JAX/Pallas equivalent of the PyTorch LIF_Node module (forward pass)."""

    def __init__(self, LIF_tau: float):
        # sigmoid(tau), computed once at init (matches torch.sigmoid(tensor(tau)))
        self.LIF_decay = float(jax.nn.sigmoid(jnp.float32(LIF_tau)))

    # ---- tiled (rows, 128) path: numel % 128 == 0, free reshape, no pad ----
    def _call_2d(self, u2, s2, i2, dtype, itemsize, packing, rows):
        max_tile_rows = max(
            packing,
            (_TILE_TARGET_BYTES // (_LANES * itemsize)) // packing * packing)
        num_cores = _num_tensorcores()

        if num_cores >= 2:
            if rows >= 2 * packing:
                # v7x: target >= 4 grid steps (>= 2 blocks per TC) so each core
                # keeps its input prefetch / output writeback pipelined.
                tile_rows = min(max_tile_rows,
                                max(packing, (rows // 4) // packing * packing))
            else:
                tile_rows = rows
        else:
            # v5e / v6e: single TensorCore -> extra grid steps on a small input
            # are pure ~0.35 us overhead; use one block when it fits.
            tile_rows = rows if rows <= max_tile_rows else max_tile_rows

        grid = (int(pl.cdiv(rows, tile_rows)),)
        blk = pl.BlockSpec((tile_rows, _LANES), lambda r: (r, 0))

        n = rows * _LANES
        cost = pl.CostEstimate(flops=4 * n, transcendentals=0,
                               bytes_accessed=5 * n * itemsize)

        return pl.pallas_call(
            functools.partial(_lif_kernel, decay=self.LIF_decay),
            out_shape=(
                jax.ShapeDtypeStruct((rows, _LANES), dtype),
                jax.ShapeDtypeStruct((rows, _LANES), dtype),
            ),
            grid_spec=pltpu.PrefetchScalarGridSpec(
                num_scalar_prefetch=0,
                grid=grid,
                in_specs=[blk, blk, blk],
                out_specs=(blk, blk),
            ),
            compiler_params=pltpu.CompilerParams(
                dimension_semantics=("parallel",),
                vmem_limit_bytes=_VMEM_LIMIT_BYTES,
            ),
            cost_estimate=cost,
        )(u2, s2, i2)

    # ---- ragged path: single full-array (1, n) block, no pad / no slice ----
    def _call_full_block(self, u2, s2, i2, dtype, itemsize, n):
        blk = pl.BlockSpec((1, n), lambda r: (0, 0))
        cost = pl.CostEstimate(flops=4 * n, transcendentals=0,
                               bytes_accessed=5 * n * itemsize)
        return pl.pallas_call(
            functools.partial(_lif_kernel, decay=self.LIF_decay),
            out_shape=(
                jax.ShapeDtypeStruct((1, n), dtype),
                jax.ShapeDtypeStruct((1, n), dtype),
            ),
            grid_spec=pltpu.PrefetchScalarGridSpec(
                num_scalar_prefetch=0,
                grid=(1,),
                in_specs=[blk, blk, blk],
                out_specs=(blk, blk),
            ),
            compiler_params=pltpu.CompilerParams(
                dimension_semantics=("arbitrary",),
                vmem_limit_bytes=_VMEM_LIMIT_BYTES,
            ),
            cost_estimate=cost,
        )(u2, s2, i2)

    def __call__(self, LIF_U, S_before, I_in):
        orig_shape = LIF_U.shape
        dtype = LIF_U.dtype
        itemsize = jnp.dtype(dtype).itemsize
        packing = _PACKING.get(itemsize, 8)
        n = math.prod(orig_shape) if orig_shape else 1

        if n % _LANES == 0:
            # Free contiguous reshape to a lane-dense slab; no HBM copies.
            rows = n // _LANES
            to2d = lambda x: jnp.ravel(x).reshape(rows, _LANES)
            u_out2, s_out2 = self._call_2d(
                to2d(LIF_U), to2d(S_before), to2d(I_in),
                dtype, itemsize, packing, rows)
            return u_out2.reshape(orig_shape), s_out2.reshape(orig_shape)

        if n * itemsize <= _TILE_TARGET_BYTES:
            # Ragged but small: one full-array block; still no pad/slice copies.
            to2d = lambda x: jnp.ravel(x).reshape(1, n)
            u_out2, s_out2 = self._call_full_block(
                to2d(LIF_U), to2d(S_before), to2d(I_in), dtype, itemsize, n)
            return u_out2.reshape(orig_shape), s_out2.reshape(orig_shape)

        # TODO(synk): large ragged sizes (numel % 128 != 0 and > ~2 MiB) fall
        # back to pad + slice, which adds wrapper-side HBM copies; prefer a
        # caller layout whose element count is a multiple of 128.
        rows = int(pl.cdiv(n, _LANES))
        n_pad = rows * _LANES

        def to2d_pad(x):
            x = jnp.ravel(x)
            x = jnp.pad(x, (0, n_pad - n))
            return x.reshape(rows, _LANES)

        u_out2, s_out2 = self._call_2d(
            to2d_pad(LIF_U), to2d_pad(S_before), to2d_pad(I_in),
            dtype, itemsize, packing, rows)
        u_out = u_out2.reshape(-1)[:n].reshape(orig_shape)
        s_out = s_out2.reshape(-1)[:n].reshape(orig_shape)
        return u_out, s_out


def _reference(decay, u, s, i):
    u_new = decay * u * (1.0 - s) + i
    s_new = (u_new >= 0.0).astype(u.dtype)
    return u_new, s_new


if __name__ == "__main__":
    key = jax.random.PRNGKey(0)
    k1, k2, k3 = jax.random.split(key, 3)

    node = LIFNodePallas(LIF_tau=2.0)

    # NCHW-shaped state / input tensors (batch=2, channels=4, spatial=16x16);
    # numel = 2048 -> lane-dense (16, 128) path.
    shape = (2, 4, 16, 16)
    LIF_U = jax.random.normal(k1, shape, dtype=jnp.float32)
    S_before = (jax.random.uniform(k2, shape) > 0.5).astype(jnp.float32)
    I_in = jax.random.normal(k3, shape, dtype=jnp.float32)

    u_out, s_out = node(LIF_U, S_before, I_in)
    jax.block_until_ready((u_out, s_out))

    u_ref, s_ref = _reference(node.LIF_decay, LIF_U, S_before, I_in)
    assert u_out.shape == shape and s_out.shape == shape
    assert jnp.allclose(u_out, u_ref, atol=1e-6, rtol=1e-6)
    assert jnp.allclose(s_out, s_ref)

    # Ragged element count (numel % 128 != 0) -> single full-block path,
    # exercised to validate the no-pad boundary handling.
    shape2 = (3, 5, 9, 16)  # 2160 elems
    U2 = jax.random.normal(k1, shape2, dtype=jnp.float32)
    S2 = (jax.random.uniform(k2, shape2) > 0.5).astype(jnp.float32)
    I2 = jax.random.normal(k3, shape2, dtype=jnp.float32)
    u2o, s2o = node(U2, S2, I2)
    jax.block_until_ready((u2o, s2o))
    u2r, s2r = _reference(node.LIF_decay, U2, S2, I2)
    assert jnp.allclose(u2o, u2r, atol=1e-6, rtol=1e-6)
    assert jnp.allclose(s2o, s2r)

    print("KERNEL_OK")
</pallas_src>

<mosaic_0001>
module attributes {stable_mosaic.version = 11 : i64} {
  func.func @_lif_kernel(%arg0: i32, %arg1: memref<16x128xf32, #tpu.memory_space<vmem>>, %arg2: memref<16x128xf32, #tpu.memory_space<vmem>>, %arg3: memref<16x128xf32, #tpu.memory_space<vmem>>, %arg4: memref<16x128xf32, #tpu.memory_space<vmem>>, %arg5: memref<16x128xf32, #tpu.memory_space<vmem>>) attributes {dimension_semantics = [#tpu.dimension_semantics<parallel>], iteration_bounds = array<i64: 1>, scalar_prefetch = 0 : i64, scratch_operands = 0 : i64, tpu.core_type = #tpu.core_type<tc>, window_params = [{transform_indices = @transform_0, window_bounds = array<i64: 16, 128>}, {transform_indices = @transform_1, window_bounds = array<i64: 16, 128>}, {transform_indices = @transform_2, window_bounds = array<i64: 16, 128>}, {transform_indices = @transform_3, window_bounds = array<i64: 16, 128>}, {transform_indices = @transform_4, window_bounds = array<i64: 16, 128>}]} {
    %c0 = arith.constant 0 : index
    %c0_0 = arith.constant 0 : index
    %0 = vector.load %arg1[%c0, %c0_0] : memref<16x128xf32, #tpu.memory_space<vmem>>, vector<16x128xf32>
    %c0_1 = arith.constant 0 : index
    %c0_2 = arith.constant 0 : index
    %1 = vector.load %arg2[%c0_1, %c0_2] : memref<16x128xf32, #tpu.memory_space<vmem>>, vector<16x128xf32>
    %c0_3 = arith.constant 0 : index
    %c0_4 = arith.constant 0 : index
    %2 = vector.load %arg3[%c0_3, %c0_4] : memref<16x128xf32, #tpu.memory_space<vmem>>, vector<16x128xf32>
    %cst = arith.constant 8.807970e-01 : f32
    %3 = vector.broadcast %cst : f32 to vector<16x128xf32>
    %4 = arith.mulf %3, %0 : vector<16x128xf32>
    %cst_5 = arith.constant 1.000000e+00 : f32
    %5 = vector.broadcast %cst_5 : f32 to vector<16x128xf32>
    %6 = arith.subf %5, %1 : vector<16x128xf32>
    %7 = arith.mulf %4, %6 : vector<16x128xf32>
    %8 = arith.addf %7, %2 : vector<16x128xf32>
    %c0_6 = arith.constant 0 : index
    %c0_7 = arith.constant 0 : index
    %9 = vector.load %arg4[%c0_6, %c0_7] : memref<16x128xf32, #tpu.memory_space<vmem>>, vector<16x128xf32>
    tpu.vector_store %arg4[%c0_6, %c0_7], %8 {strides = array<i32>} : memref<16x128xf32, #tpu.memory_space<vmem>>, vector<16x128xf32>,
    %cst_8 = arith.constant 0.000000e+00 : f32
    %10 = vector.broadcast %cst_8 : f32 to vector<16x128xf32>
    %11 = arith.cmpf oge, %8, %10 : vector<16x128xf32>
    %12 = arith.extui %11 : vector<16x128xi1> to vector<16x128xi32>
    %13 = arith.sitofp %12 : vector<16x128xi32> to vector<16x128xf32>
    %c0_9 = arith.constant 0 : index
    %c0_10 = arith.constant 0 : index
    %14 = vector.load %arg5[%c0_9, %c0_10] : memref<16x128xf32, #tpu.memory_space<vmem>>, vector<16x128xf32>
    tpu.vector_store %arg5[%c0_9, %c0_10], %13 {strides = array<i32>} : memref<16x128xf32, #tpu.memory_space<vmem>>, vector<16x128xf32>,
    return
  }
  func.func @transform_0(%arg0: i32) -> (i32, i32) {
    %c0_i32 = arith.constant 0 : i32
    %c0_i32_0 = arith.constant 0 : i32
    return %arg0, %c0_i32 : i32, i32
  }
  func.func @transform_1(%arg0: i32) -> (i32, i32) {
    %c0_i32 = arith.constant 0 : i32
    %c0_i32_0 = arith.constant 0 : i32
    return %arg0, %c0_i32 : i32, i32
  }
  func.func @transform_2(%arg0: i32) -> (i32, i32) {
    %c0_i32 = arith.constant 0 : i32
    %c0_i32_0 = arith.constant 0 : i32
    return %arg0, %c0_i32 : i32, i32
  }
  func.func @transform_3(%arg0: i32) -> (i32, i32) {
    %c0_i32 = arith.constant 0 : i32
    %c0_i32_0 = arith.constant 0 : i32
    return %arg0, %c0_i32 : i32, i32
  }
  func.func @transform_4(%arg0: i32) -> (i32, i32) {
    %c0_i32 = arith.constant 0 : i32
    %c0_i32_0 = arith.constant 0 : i32
    return %arg0, %c0_i32 : i32, i32
  }
}

</mosaic_0001>

<llo_original>
// kernel: tpu_custom_call.1
$region0: #{tpu_custom_call.1}
  #allocation0 [shape = 'u32[]', space=smem, size = 0x4, offset = 0x4, fixed_abs, tag = 'smem constant byte address 0x4 - core index']
  #allocation1 [shape = 'u32[72,128]{1,0:T(1,128)}', space=vmem, size = 0x9000, scoped, tag = 'internal scratch']
  %s0 = inlined_call_operand.hbm [shape: f32[16,128], index: 0, kind: input, shape index: {}]
  %s1 = inlined_call_operand.hbm [shape: f32[16,128], index: 1, kind: input, shape index: {}]
  %s2 = inlined_call_operand.hbm [shape: f32[16,128], index: 2, kind: input, shape index: {}]
  %s3 = inlined_call_operand.hbm [shape: f32[16,128], index: 3, kind: output, shape index: {0}]
  %s4 = inlined_call_operand.hbm [shape: f32[16,128], index: 4, kind: output, shape index: {1}]
  %5 = xla_tuple %s3, %s4
  %s6 = sld [smem:[#allocation0]]
  $region42: #{tpu_custom_call.1} parent=0
    _
  %s8 = ssub.s32 1, %s6
  %s9 = scalar_select 0, %s8, %s6
  $region1: #{tpu_custom_call.1} parent=0
    #allocation2 [shape = 'u8[8192]{0}', space=vmem, size = 0x2000, scoped, tag = 'input window, operand 0, single buffered']
    #allocation3 [shape = 's32[1]{0}', space=sflag, size = 0x4, scoped, tag = 'scoped memory for tpu_custom_call.1']
    #allocation4 [shape = 's32[1]{0}', space=sflag, size = 0x4, scoped, tag = 'scoped memory for tpu_custom_call.1']
    #allocation5 [shape = 'u8[8192]{0}', space=vmem, size = 0x2000, scoped, tag = 'input window, operand 1, single buffered']
    #allocation6 [shape = 's32[1]{0}', space=sflag, size = 0x4, scoped, tag = 'scoped memory for tpu_custom_call.1']
    #allocation7 [shape = 'u8[8192]{0}', space=vmem, size = 0x2000, scoped, tag = 'input window, operand 2, single buffered']
    #allocation8 [shape = 'u8[8192]{0}', space=vmem, size = 0x2000, scoped, tag = 'output window, operand 0, single buffered']
    #allocation9 [shape = 'u8[8192]{0}', space=vmem, size = 0x2000, scoped, tag = 'output window, operand 1, single buffered']
    #allocation10 [shape = 's32[1]{0}', space=sflag, size = 0x4, scoped, tag = 'scoped memory for tpu_custom_call.1']
    %10 = vsyncpa [#allocation3], 0
    %11 = vsyncpa [#allocation6], 0
    %12 = vsyncpa [#allocation4], 0
    %13 = vsyncpa [#allocation10], 0
    // Predicated region
    $region2: #{tpu_custom_call.1} parent=1 // pred_check
      _
    $region3: #{tpu_custom_call.1} parent=1 // pred_check_branch
      %15 = sbr.rel (0) target = $region5
    $region4: #{tpu_custom_call.1} parent=1 // pred_region
      %17 = vsyncadd [#allocation3], 0
      %s18 = sshll.u32 %s0, 4
      %s19 = int_to_ptr.hbm [resolvable:$true] %s18
      %s20 = sshll.u32 [#allocation2], 4
      %s21 = int_to_ptr.vmem [resolvable:$true] %s20
      %26 = dma.hbm_to_vmem [thread:$0]  %s19, 256, %s21, [#allocation3], 128, 128, 8
    $region5: #{tpu_custom_call.1} parent=1 // pred_fallthru
      _
    // Predicated region
    $region6: #{tpu_custom_call.1} parent=1 // pred_check
      _
    $region7: #{tpu_custom_call.1} parent=1 // pred_check_branch
      %28 = sbr.rel (0) target = $region9
    $region8: #{tpu_custom_call.1} parent=1 // pred_region
      %30 = vsyncadd [#allocation6], 0
      %s31 = sshll.u32 %s1, 4
      %s32 = int_to_ptr.hbm [resolvable:$true] %s31
      %s33 = sshll.u32 [#allocation5], 4
      %s34 = int_to_ptr.vmem [resolvable:$true] %s33
      %39 = dma.hbm_to_vmem [thread:$0]  %s32, 256, %s34, [#allocation6], 128, 128, 8
    $region9: #{tpu_custom_call.1} parent=1 // pred_fallthru
      _
    // Predicated region
    $region10: #{tpu_custom_call.1} parent=1 // pred_check
      _
    $region11: #{tpu_custom_call.1} parent=1 // pred_check_branch
      %41 = sbr.rel (0) target = $region13
    $region12: #{tpu_custom_call.1} parent=1 // pred_region
      %43 = vsyncadd [#allocation6], 0
      %s44 = sshll.u32 %s2, 4
      %s45 = int_to_ptr.hbm [resolvable:$true] %s44
      %s46 = sshll.u32 [#allocation7], 4
      %s47 = int_to_ptr.vmem [resolvable:$true] %s46
      %52 = dma.hbm_to_vmem [thread:$0]  %s45, 256, %s47, [#allocation6], 128, 128, 8
    $region13: #{tpu_custom_call.1} parent=1 // pred_fallthru
      _
    // Predicated region
    $region14: #{tpu_custom_call.1} parent=1 // pred_check
      _
    $region15: #{tpu_custom_call.1} parent=1 // pred_check_branch
      %54 = sbr.rel (0) target = $region17
    $region16: #{tpu_custom_call.1} parent=1 // pred_region
      %56 = dma.done [#allocation3], 256
    $region17: #{tpu_custom_call.1} parent=1 // pred_fallthru
      _
    // Predicated region
    $region18: #{tpu_custom_call.1} parent=1 // pred_check
      _
    $region19: #{tpu_custom_call.1} parent=1 // pred_check_branch
      %58 = sbr.rel (0) target = $region21
    $region20: #{tpu_custom_call.1} parent=1 // pred_region
      %60 = dma.done [#allocation6], 256
    $region21: #{tpu_custom_call.1} parent=1 // pred_fallthru
      _
    // Predicated region
    $region22: #{tpu_custom_call.1} parent=1 // pred_check
      _
    $region23: #{tpu_custom_call.1} parent=1 // pred_check_branch
      %62 = sbr.rel (0) target = $region25
    $region24: #{tpu_custom_call.1} parent=1 // pred_region
      %64 = dma.done [#allocation6], 256
    $region25: #{tpu_custom_call.1} parent=1 // pred_fallthru
      _
    %v65 = vld [vmem:[#allocation2] sm:$0xff]
    %v66 = vld [vmem:[#allocation2 + $0x8] sm:$0xff]
    %v67 = vld [vmem:[#allocation5] sm:$0xff]
    %v68 = vld [vmem:[#allocation5 + $0x8] sm:$0xff]
    %v69 = vld [vmem:[#allocation7] sm:$0xff]
    %v70 = vld [vmem:[#allocation7 + $0x8] sm:$0xff]
    %v71 = vmul.f32 %v65, 0.880797
    %v72 = vmul.f32 %v66, 0.880797
    %v73 = vsub.f32 1.0, %v67
    %v74 = vsub.f32 1.0, %v68
    %v75 = vmul.f32 %v71, %v73
    %v76 = vmul.f32 %v72, %v74
    %v77 = vadd.f32 %v75, %v69
    %v78 = vadd.f32 %v76, %v70
    %79 = vst [vmem:[#allocation8] sm:$0xff] %v77
    %80 = vst [vmem:[#allocation8 + $0x8] sm:$0xff] %v78
    %vm81 = vcmp.ge.f32.partialorder %v77, 0.0
    %vm82 = vcmp.ge.f32.partialorder %v78, 0.0
    %v83 = vsel %vm81, 1, 0
    %v84 = vsel %vm82, 1, 0
    %v85 = vcvt.s32.f32 %v83
    %v86 = vcvt.s32.f32 %v84
    %87 = vst [vmem:[#allocation9] sm:$0xff] %v85
    %88 = vst [vmem:[#allocation9 + $0x8] sm:$0xff] %v86
    // Predicated region
    $region26: #{tpu_custom_call.1} parent=1 // pred_check
      _
    $region27: #{tpu_custom_call.1} parent=1 // pred_check_branch
      %90 = sbr.rel (0) target = $region29
    $region28: #{tpu_custom_call.1} parent=1 // pred_region
      %92 = vsyncadd [#allocation4], 0
      %s93 = sshll.u32 [#allocation8], 4
      %s94 = int_to_ptr.vmem [resolvable:$true] %s93
      %s95 = sshll.u32 %s3, 4
      %s96 = int_to_ptr.hbm [resolvable:$true] %s95
      %101 = dma.vmem_to_hbm [thread:$0]  %s94, 256, %s96, [#allocation4], 128, 128, 8
    $region29: #{tpu_custom_call.1} parent=1 // pred_fallthru
      _
    // Predicated region
    $region30: #{tpu_custom_call.1} parent=1 // pred_check
      _
    $region31: #{tpu_custom_call.1} parent=1 // pred_check_branch
      %103 = sbr.rel (0) target = $region33
    $region32: #{tpu_custom_call.1} parent=1 // pred_region
      %105 = vsyncadd [#allocation10], 0
      %s106 = sshll.u32 [#allocation9], 4
      %s107 = int_to_ptr.vmem [resolvable:$true] %s106
      %s108 = sshll.u32 %s4, 4
      %s109 = int_to_ptr.hbm [resolvable:$true] %s108
      %114 = dma.vmem_to_hbm [thread:$0]  %s107, 256, %s109, [#allocation10], 128, 128, 8
    $region33: #{tpu_custom_call.1} parent=1 // pred_fallthru
      _
    // Predicated region
    $region34: #{tpu_custom_call.1} parent=1 // pred_check
      _
    $region35: #{tpu_custom_call.1} parent=1 // pred_check_branch
      %116 = sbr.rel (0) target = $region37
    $region36: #{tpu_custom_call.1} parent=1 // pred_region
      %118 = dma.done [#allocation4], 256
    $region37: #{tpu_custom_call.1} parent=1 // pred_fallthru
      _
    // Predicated region
    $region38: #{tpu_custom_call.1} parent=1 // pred_check
      _
    $region39: #{tpu_custom_call.1} parent=1 // pred_check_branch
      %120 = sbr.rel (0) target = $region41
    $region40: #{tpu_custom_call.1} parent=1 // pred_region
      %122 = dma.done [#allocation10], 256
    $region41: #{tpu_custom_call.1} parent=1 // pred_fallthru
      _
    %123 = vsyncpa [#allocation3], 1
    %124 = vsyncpa [#allocation6], 1
    %125 = vsyncpa [#allocation4], 1
    %126 = vsyncpa [#allocation10], 1

</llo_original>
